<compile_context>
chip_gen: v7x
topology: tpu7x:2x2x1
jax: 0.10.0
libtpu: 0.0.40
codegen_flags: <defaults>
</compile_context>

<pallas_src>
import jax
import jax.numpy as jnp
from jax.experimental import pallas as pl
from jax.experimental.pallas import tpu as pltpu


def _round_up(n, m):
    return ((n + m - 1) // m) * m


def mlp_kernel(x_ref, w1_ref, b1_ref, w2_ref, b2_ref, w3_ref, b3_ref, o_ref):
    # fc1 + relu (MXU, f32 accumulation)
    h1 = jnp.dot(x_ref[...], w1_ref[...], preferred_element_type=jnp.float32)
    h1 = jnp.maximum(h1 + b1_ref[...], 0.0)
    # fc2 + relu
    h2 = jnp.dot(h1, w2_ref[...], preferred_element_type=jnp.float32)
    h2 = jnp.maximum(h2 + b2_ref[...], 0.0)
    # fc3: output width is 1, so use VPU multiply + XLU cross-lane reduce instead
    # of a degenerate MXU matmul, and store only the single real column.
    out = jnp.sum(h2 * w3_ref[...], axis=-1, keepdims=True) + b3_ref[...]
    o_ref[...] = out.astype(o_ref.dtype)


def simple_nn_forward(x, params, *, block_m=1024):
    """Fused MLP forward. Streams x/out over a batch grid; weights stay VMEM-resident."""
    w1, b1, w2, b2, w3, b3 = params
    B, D = x.shape
    out_dim = w3.shape[1]  # 1 for SimpleNN

    # fc3 weight as a (1, hidden) row for broadcasting against (tm, hidden).
    w3_row = w3.T.reshape(1, w3.shape[0])
    b3_row = b3.reshape(1, out_dim)

    # Batch tile: multiple of 8 (f32 sublanes). Guarantee >= 2 grid steps when the
    # batch allows it so both v7x TensorCores get work and the pipeline overlaps.
    tm = min(block_m, _round_up(B, 8))
    if B > 8:
        tm = min(tm, _round_up((B + 1) // 2, 8))
    Bp = _round_up(B, tm)
    if Bp != B:
        x = jnp.pad(x, ((0, Bp - B), (0, 0)))
    grid = (Bp // tm,)

    # Advisory cost hint for XLA scheduling around the custom call.
    h1_dim, h2_dim = w1.shape[1], w2.shape[1]
    flops = 2 * Bp * (D * h1_dim + h1_dim * h2_dim + h2_dim * out_dim)
    weight_bytes = sum(int(a.size) * a.dtype.itemsize for a in (w1, b1, w2, b2, w3, b3))
    bytes_accessed = Bp * (D + out_dim) * 4 + weight_bytes
    cost = pl.CostEstimate(flops=flops, transcendentals=0, bytes_accessed=bytes_accessed)

    out = pl.pallas_call(
        mlp_kernel,
        out_shape=jax.ShapeDtypeStruct((Bp, out_dim), jnp.float32),
        grid=grid,
        in_specs=[
            pl.BlockSpec((tm, D), lambda i: (i, 0)),       # streamed x tiles
            pl.BlockSpec(w1.shape, lambda i: (0, 0)),      # VMEM-resident weights
            pl.BlockSpec(b1.shape, lambda i: (0, 0)),
            pl.BlockSpec(w2.shape, lambda i: (0, 0)),
            pl.BlockSpec(b2.shape, lambda i: (0, 0)),
            pl.BlockSpec(w3_row.shape, lambda i: (0, 0)),
            pl.BlockSpec(b3_row.shape, lambda i: (0, 0)),
        ],
        out_specs=pl.BlockSpec((tm, out_dim), lambda i: (i, 0)),
        compiler_params=pltpu.CompilerParams(
            dimension_semantics=("parallel",),             # shards batch tiles across TCs on v7x
        ),
        cost_estimate=cost,
    )(x, w1, b1, w2, b2, w3_row, b3_row)

    # Strip batch padding (padded rows carry bias garbage; they are discarded here).
    return out[:B]


def init_params(key, input_dim):
    """Deterministic init matching SimpleNN layer shapes (stored as (in, out))."""
    k1, k2, k3, k4, k5, k6 = jax.random.split(key, 6)
    w1 = jax.random.normal(k1, (input_dim, 64), jnp.float32) * 0.1
    b1 = jax.random.normal(k2, (1, 64), jnp.float32) * 0.1
    w2 = jax.random.normal(k3, (64, 32), jnp.float32) * 0.1
    b2 = jax.random.normal(k4, (1, 32), jnp.float32) * 0.1
    w3 = jax.random.normal(k5, (32, 1), jnp.float32) * 0.1
    b3 = jax.random.normal(k6, (1, 1), jnp.float32) * 0.1
    return (w1, b1, w2, b2, w3, b3)


def reference_forward(x, params):
    w1, b1, w2, b2, w3, b3 = params
    h1 = jnp.maximum(x @ w1 + b1, 0.0)
    h2 = jnp.maximum(h1 @ w2 + b2, 0.0)
    return h2 @ w3 + b3


if __name__ == "__main__":
    key = jax.random.PRNGKey(0)
    kx, kp = jax.random.split(key)

    batch, input_dim = 64, 16
    x = jax.random.normal(kx, (batch, input_dim), jnp.float32)
    params = init_params(kp, input_dim)

    # tm is capped to ceil(B/2) rounded to 8, so this exercises a 2-step grid.
    out = jax.block_until_ready(simple_nn_forward(x, params))
    ref = reference_forward(x, params)
    assert out.shape == (batch, 1)
    assert jnp.allclose(out, ref, atol=1e-5, rtol=1e-5)

    # Ragged batch (B not a multiple of the tile) -> padded-batch path.
    out2 = jax.block_until_ready(simple_nn_forward(x[:13], params))
    assert out2.shape == (13, 1)
    assert jnp.allclose(out2, ref[:13], atol=1e-5, rtol=1e-5)

    print("KERNEL_OK")
</pallas_src>

<mosaic_0001>
module attributes {stable_mosaic.version = 11 : i64} {
  func.func @mlp_kernel(%arg0: i32, %arg1: memref<32x16xf32, #tpu.memory_space<vmem>>, %arg2: memref<16x64xf32, #tpu.memory_space<vmem>>, %arg3: memref<1x64xf32, #tpu.memory_space<vmem>>, %arg4: memref<64x32xf32, #tpu.memory_space<vmem>>, %arg5: memref<1x32xf32, #tpu.memory_space<vmem>>, %arg6: memref<1x32xf32, #tpu.memory_space<vmem>>, %arg7: memref<1x1xf32, #tpu.memory_space<vmem>>, %arg8: memref<32x1xf32, #tpu.memory_space<vmem>>) attributes {dimension_semantics = [#tpu.dimension_semantics<parallel>], iteration_bounds = array<i64: 2>, scalar_prefetch = 0 : i64, scratch_operands = 0 : i64, tpu.core_type = #tpu.core_type<tc>, window_params = [{transform_indices = @transform_0, window_bounds = array<i64: 32, 16>}, {pipeline_mode = #tpu.pipeline_mode<synchronous>, transform_indices = @transform_1, window_bounds = array<i64: 16, 64>}, {pipeline_mode = #tpu.pipeline_mode<synchronous>, transform_indices = @transform_2, window_bounds = array<i64: 1, 64>}, {pipeline_mode = #tpu.pipeline_mode<synchronous>, transform_indices = @transform_3, window_bounds = array<i64: 64, 32>}, {pipeline_mode = #tpu.pipeline_mode<synchronous>, transform_indices = @transform_4, window_bounds = array<i64: 1, 32>}, {pipeline_mode = #tpu.pipeline_mode<synchronous>, transform_indices = @transform_5, window_bounds = array<i64: 1, 32>}, {pipeline_mode = #tpu.pipeline_mode<synchronous>, transform_indices = @transform_6, window_bounds = array<i64: 1, 1>}, {transform_indices = @transform_7, window_bounds = array<i64: 32, 1>}]} {
    %c0 = arith.constant 0 : index
    %c0_0 = arith.constant 0 : index
    %0 = vector.load %arg1[%c0, %c0_0] : memref<32x16xf32, #tpu.memory_space<vmem>>, vector<32x16xf32>
    %c0_1 = arith.constant 0 : index
    %c0_2 = arith.constant 0 : index
    %1 = vector.load %arg2[%c0_1, %c0_2] : memref<16x64xf32, #tpu.memory_space<vmem>>, vector<16x64xf32>
    %cst = arith.constant dense<0.000000e+00> : vector<32x64xf32>
    %2 = tpu.matmul %0, %1, %cst {dimension_numbers = #tpu.dot_dimension_numbers<[1], [0], [0], [1], [0, 0, 1, 1], [], []>} : vector<32x16xf32>, vector<16x64xf32>, vector<32x64xf32> -> vector<32x64xf32>
    %c0_3 = arith.constant 0 : index
    %c0_4 = arith.constant 0 : index
    %3 = vector.load %arg3[%c0_3, %c0_4] : memref<1x64xf32, #tpu.memory_space<vmem>>, vector<1x64xf32>
    %4 = vector.broadcast %3 : vector<1x64xf32> to vector<32x64xf32>
    %5 = arith.addf %2, %4 : vector<32x64xf32>
    %cst_5 = arith.constant 0.000000e+00 : f32
    %6 = vector.broadcast %cst_5 : f32 to vector<32x64xf32>
    %7 = arith.maximumf %5, %6 : vector<32x64xf32>
    %c0_6 = arith.constant 0 : index
    %c0_7 = arith.constant 0 : index
    %8 = vector.load %arg4[%c0_6, %c0_7] : memref<64x32xf32, #tpu.memory_space<vmem>>, vector<64x32xf32>
    %cst_8 = arith.constant dense<0.000000e+00> : vector<32x32xf32>
    %9 = tpu.matmul %7, %8, %cst_8 {dimension_numbers = #tpu.dot_dimension_numbers<[1], [0], [0], [1], [0, 0, 1, 1], [], []>} : vector<32x64xf32>, vector<64x32xf32>, vector<32x32xf32> -> vector<32x32xf32>
    %c0_9 = arith.constant 0 : index
    %c0_10 = arith.constant 0 : index
    %10 = vector.load %arg5[%c0_9, %c0_10] : memref<1x32xf32, #tpu.memory_space<vmem>>, vector<1x32xf32>
    %11 = vector.broadcast %10 : vector<1x32xf32> to vector<32x32xf32>
    %12 = arith.addf %9, %11 : vector<32x32xf32>
    %cst_11 = arith.constant 0.000000e+00 : f32
    %13 = vector.broadcast %cst_11 : f32 to vector<32x32xf32>
    %14 = arith.maximumf %12, %13 : vector<32x32xf32>
    %c0_12 = arith.constant 0 : index
    %c0_13 = arith.constant 0 : index
    %15 = vector.load %arg6[%c0_12, %c0_13] : memref<1x32xf32, #tpu.memory_space<vmem>>, vector<1x32xf32>
    %16 = vector.broadcast %15 : vector<1x32xf32> to vector<32x32xf32>
    %17 = arith.mulf %14, %16 : vector<32x32xf32>
    %cst_14 = arith.constant dense<0.000000e+00> : vector<32xf32>
    %18 = vector.multi_reduction <add>, %17, %cst_14 [1] : vector<32x32xf32> to vector<32xf32>
    %19 = vector.shape_cast %18 : vector<32xf32> to vector<32x1xf32>
    %c0_15 = arith.constant 0 : index
    %c0_16 = arith.constant 0 : index
    %20 = vector.load %arg7[%c0_15, %c0_16] : memref<1x1xf32, #tpu.memory_space<vmem>>, vector<1x1xf32>
    %21 = vector.broadcast %20 : vector<1x1xf32> to vector<32x1xf32>
    %22 = arith.addf %19, %21 : vector<32x1xf32>
    %c0_17 = arith.constant 0 : index
    %c0_18 = arith.constant 0 : index
    %23 = vector.load %arg8[%c0_17, %c0_18] : memref<32x1xf32, #tpu.memory_space<vmem>>, vector<32x1xf32>
    tpu.vector_store %arg8[%c0_17, %c0_18], %22 {strides = array<i32>} : memref<32x1xf32, #tpu.memory_space<vmem>>, vector<32x1xf32>,
    return
  }
  func.func @transform_0(%arg0: i32) -> (i32, i32) {
    %c0_i32 = arith.constant 0 : i32
    %c0_i32_0 = arith.constant 0 : i32
    return %arg0, %c0_i32 : i32, i32
  }
  func.func @transform_1(%arg0: i32) -> (i32, i32) {
    %c0_i32 = arith.constant 0 : i32
    %c0_i32_0 = arith.constant 0 : i32
    %c0_i32_1 = arith.constant 0 : i32
    return %c0_i32, %c0_i32_0 : i32, i32
  }
  func.func @transform_2(%arg0: i32) -> (i32, i32) {
    %c0_i32 = arith.constant 0 : i32
    %c0_i32_0 = arith.constant 0 : i32
    %c0_i32_1 = arith.constant 0 : i32
    return %c0_i32, %c0_i32_0 : i32, i32
  }
  func.func @transform_3(%arg0: i32) -> (i32, i32) {
    %c0_i32 = arith.constant 0 : i32
    %c0_i32_0 = arith.constant 0 : i32
    %c0_i32_1 = arith.constant 0 : i32
    return %c0_i32, %c0_i32_0 : i32, i32
  }
  func.func @transform_4(%arg0: i32) -> (i32, i32) {
    %c0_i32 = arith.constant 0 : i32
    %c0_i32_0 = arith.constant 0 : i32
    %c0_i32_1 = arith.constant 0 : i32
    return %c0_i32, %c0_i32_0 : i32, i32
  }
  func.func @transform_5(%arg0: i32) -> (i32, i32) {
    %c0_i32 = arith.constant 0 : i32
    %c0_i32_0 = arith.constant 0 : i32
    %c0_i32_1 = arith.constant 0 : i32
    return %c0_i32, %c0_i32_0 : i32, i32
  }
  func.func @transform_6(%arg0: i32) -> (i32, i32) {
    %c0_i32 = arith.constant 0 : i32
    %c0_i32_0 = arith.constant 0 : i32
    %c0_i32_1 = arith.constant 0 : i32
    return %c0_i32, %c0_i32_0 : i32, i32
  }
  func.func @transform_7(%arg0: i32) -> (i32, i32) {
    %c0_i32 = arith.constant 0 : i32
    %c0_i32_0 = arith.constant 0 : i32
    return %arg0, %c0_i32 : i32, i32
  }
}

</mosaic_0001>

<llo_original>
// kernel: tpu_custom_call.1
$region0: #{tpu_custom_call.1}
  #allocation0 [shape = 'u32[]', space=smem, size = 0x4, offset = 0x4, fixed_abs, tag = 'smem constant byte address 0x4 - core index']
  #allocation1 [shape = 'u32[144,128]{1,0:T(1,128)}', space=vmem, size = 0x12000, scoped, tag = 'internal scratch']
  #allocation2 [shape = 'f32[1,1]{1,0:T(1,128)S(1)}', space=vmem, size = 0x200, scoped, tag = 'scoped memory for tpu_custom_call.1']
  %s0 = inlined_call_operand.vmem [shape: f32[64,16], index: 0, kind: input, shape index: {}]
  %s1 = inlined_call_operand.vmem [shape: f32[16,64], index: 1, kind: input, shape index: {}]
  %s2 = inlined_call_operand.vmem [shape: f32[1,64], index: 2, kind: input, shape index: {}]
  %s3 = inlined_call_operand.vmem [shape: f32[64,32], index: 3, kind: input, shape index: {}]
  %s4 = inlined_call_operand.vmem [shape: f32[1,32], index: 4, kind: input, shape index: {}]
  %s5 = inlined_call_operand.vmem [shape: f32[1,32], index: 5, kind: input, shape index: {}]
  %s6 = inlined_call_operand.<no memory space> [shape: f32[1,1], index: 6, kind: input, shape index: {}]
  %s7 = inlined_call_operand.vmem [shape: f32[64,1], index: 7, kind: output, shape index: {}]
  %s8 = sld [smem:[#allocation0]]
  $region61: #{tpu_custom_call.1} parent=0
    _
  %s10 = ssub.s32 1, %s8
  %s11 = scalar_select 0, %s10, %s8
  %v12 = vstv %s6
  %13 = vst [vmem:[#allocation2] sm:$0x1] %v12
  loop: start=0, step=1, limit=4
  $region2: #{tpu_custom_call.1} parent=0 // loop_pre_header
    _
  $region3: #{tpu_custom_call.1} parent=0 // loop_header
    %s15 = sphi 0, %s19
    %p16 = scmp.ge.s32.totalorder %s15, 4
    %s25 = sphi 0, %s27
    %s28 = sphi 0, %s25
    %s29 = sphi 0, %s28
    %s45 = sphi 0, %s29
    %s49 = sphi 0, %s49
    %s51 = sphi 0, %s49
    %s52 = sphi 0, %s51
    %s66 = sphi 0, %s52
    %s70 = sphi 0, %s70
    %s72 = sphi 0, %s70
    %s73 = sphi 0, %s72
    %s87 = sphi 0, %s73
    %s91 = sphi 0, %s91
    %s93 = sphi 0, %s91
    %s94 = sphi 0, %s93
    %s108 = sphi 0, %s94
    %s112 = sphi 0, %s112
    %s114 = sphi 0, %s112
    %s115 = sphi 0, %s114
    %s129 = sphi 0, %s115
    %s133 = sphi 0, %s133
    %s135 = sphi 0, %s133
    %s136 = sphi 0, %s135
    %s150 = sphi 0, %s136
    %s154 = sphi 0, %s154
    %s156 = sphi 0, %s154
    %s157 = sphi 0, %s156
    %s171 = sphi 0, %s157
    %s177 = sphi 0, %s179
    %s180 = sphi 0, %s177
    %s181 = sphi 0, %s180
    %s197 = sphi 0, %s181
  $region4: #{tpu_custom_call.1} parent=0 // loop_header_branch
    %18 = sbr.rel (%p16) target = $region8
  $region5: #{tpu_custom_call.1} parent=0 // loop_body
    %s20 = ssub.s32 %s15, 1
    %s21 = ssub.s32 %s15, 2
    %s22 = sadd.s32 %s15, 1
    %s23 = ssub.s32 %s15, %s22
    %p24 = scmp.eq.s32.totalorder %s23, 0
    %s26 = sadd.s32 %s25, 1
    %s27 = scalar_select %p24, %s25, %s26
    %p30 = pneg %p24
    %p31 = scmp.eq.s32.totalorder %s15, 1
    %p32 = por %p30, %p31
    %p33 = scmp.ne.s32.totalorder %s25, %s28
    %p34 = scmp.eq.s32.totalorder %s15, 0
    %p35 = por %p33, %p34
    %p36 = scmp.ne.s32.totalorder %s25, %s28
    %p37 = scmp.eq.s32.totalorder %s20, 1
    %p38 = por %p36, %p37
    %p39 = scmp.ne.s32.totalorder %s28, %s29
    %p40 = scmp.eq.s32.totalorder %s20, 0
    %p41 = por %p39, %p40
    %p42 = scmp.ne.s32.totalorder %s28, %s29
    %p43 = scmp.eq.s32.totalorder %s21, 1
    %p44 = por %p42, %p43
    %p46 = scmp.ne.s32.totalorder %s29, %s45
    %p47 = scmp.eq.s32.totalorder %s21, 0
    %p48 = por %p46, %p47
    %s50 = sadd.s32 %s49, 1
    %p53 = scmp.eq.s32.totalorder %s15, 1
    %p54 = scmp.ne.s32.totalorder %s49, %s51
    %p55 = scmp.eq.s32.totalorder %s15, 0
    %p56 = por %p54, %p55
    %p57 = scmp.ne.s32.totalorder %s49, %s51
    %p58 = scmp.eq.s32.totalorder %s20, 1
    %p59 = por %p57, %p58
    %p60 = scmp.ne.s32.totalorder %s51, %s52
    %p61 = scmp.eq.s32.totalorder %s20, 0
    %p62 = por %p60, %p61
    %p63 = scmp.ne.s32.totalorder %s51, %s52
    %p64 = scmp.eq.s32.totalorder %s21, 1
    %p65 = por %p63, %p64
    %p67 = scmp.ne.s32.totalorder %s52, %s66
    %p68 = scmp.eq.s32.totalorder %s21, 0
    %p69 = por %p67, %p68
    %s71 = sadd.s32 %s70, 1
    %p74 = scmp.eq.s32.totalorder %s15, 1
    %p75 = scmp.ne.s32.totalorder %s70, %s72
    %p76 = scmp.eq.s32.totalorder %s15, 0
    %p77 = por %p75, %p76
    %p78 = scmp.ne.s32.totalorder %s70, %s72
    %p79 = scmp.eq.s32.totalorder %s20, 1
    %p80 = por %p78, %p79
    %p81 = scmp.ne.s32.totalorder %s72, %s73
    %p82 = scmp.eq.s32.totalorder %s20, 0
    %p83 = por %p81, %p82
    %p84 = scmp.ne.s32.totalorder %s72, %s73
    %p85 = scmp.eq.s32.totalorder %s21, 1
    %p86 = por %p84, %p85
    %p88 = scmp.ne.s32.totalorder %s73, %s87
    %p89 = scmp.eq.s32.totalorder %s21, 0
    %p90 = por %p88, %p89
    %s92 = sadd.s32 %s91, 1
    %p95 = scmp.eq.s32.totalorder %s15, 1
    %p96 = scmp.ne.s32.totalorder %s91, %s93
    %p97 = scmp.eq.s32.totalorder %s15, 0
    %p98 = por %p96, %p97
    %p99 = scmp.ne.s32.totalorder %s91, %s93
    %p100 = scmp.eq.s32.totalorder %s20, 1
    %p101 = por %p99, %p100
    %p102 = scmp.ne.s32.totalorder %s93, %s94
    %p103 = scmp.eq.s32.totalorder %s20, 0
    %p104 = por %p102, %p103
    %p105 = scmp.ne.s32.totalorder %s93, %s94
    %p106 = scmp.eq.s32.totalorder %s21, 1
    %p107 = por %p105, %p106
    %p109 = scmp.ne.s32.totalorder %s94, %s108
    %p110 = scmp.eq.s32.totalorder %s21, 0
    %p111 = por %p109, %p110
    %s113 = sadd.s32 %s112, 1
    %p116 = scmp.eq.s32.totalorder %s15, 1
    %p117 = scmp.ne.s32.totalorder %s112, %s114
    %p118 = scmp.eq.s32.totalorder %s15, 0
    %p119 = por %p117, %p118
    %p120 = scmp.ne.s32.totalorder %s112, %s114
    %p121 = scmp.eq.s32.totalorder %s20, 1
    %p122 = por %p120, %p121
    %p123 = scmp.ne.s32.totalorder %s114, %s115
    %p124 = scmp.eq.s32.totalorder %s20, 0
    %p125 = por %p123, %p124
    %p126 = scmp.ne.s32.totalorder %s114, %s115
    %p127 = scmp.eq.s32.totalorder %s21, 1
    %p128 = por %p126, %p127
    %p130 = scmp.ne.s32.totalorder %s115, %s129
    %p131 = scmp.eq.s32.totalorder %s21, 0
    %p132 = por %p130, %p131
    %s134 = sadd.s32 %s133, 1
    %p137 = scmp.eq.s32.totalorder %s15, 1
    %p138 = scmp.ne.s32.totalorder %s133, %s135
    %p139 = scmp.eq.s32.totalorder %s15, 0
    %p140 = por %p138, %p139
    %p141 = scmp.ne.s32.totalorder %s133, %s135
    %p142 = scmp.eq.s32.totalorder %s20, 1
    %p143 = por %p141, %p142
    %p144 = scmp.ne.s32.totalorder %s135, %s136
    %p145 = scmp.eq.s32.totalorder %s20, 0
    %p146 = por %p144, %p145
    %p147 = scmp.ne.s32.totalorder %s135, %s136
    %p148 = scmp.eq.s32.totalorder %s21, 1
    %p149 = por %p147, %p148
    %p151 = scmp.ne.s32.totalorder %s136, %s150
    %p152 = scmp.eq.s32.totalorder %s21, 0
    %p153 = por %p151, %p152
    %s155 = sadd.s32 %s154, 1
    %p158 = scmp.eq.s32.totalorder %s15, 1
    %p159 = scmp.ne.s32.totalorder %s154, %s156
    %p160 = scmp.eq.s32.totalorder %s15, 0
    %p161 = por %p159, %p160
    %p162 = scmp.ne.s32.totalorder %s154, %s156
    %p163 = scmp.eq.s32.totalorder %s20, 1
    %p164 = por %p162, %p163
    %p165 = scmp.ne.s32.totalorder %s156, %s157
    %p166 = scmp.eq.s32.totalorder %s20, 0
    %p167 = por %p165, %p166
    %p168 = scmp.ne.s32.totalorder %s156, %s157
    %p169 = scmp.eq.s32.totalorder %s21, 1
    %p170 = por %p168, %p169
    %p172 = scmp.ne.s32.totalorder %s157, %s171
    %p173 = scmp.eq.s32.totalorder %s21, 0
    %p174 = por %p172, %p173
    %s175 = ssub.s32 %s15, %s22
    %p176 = scmp.eq.s32.totalorder %s175, 0
    %s178 = sadd.s32 %s177, 1
    %s179 = scalar_select %p176, %s177, %s178
    %p182 = pneg %p176
    %p183 = scmp.eq.s32.totalorder %s15, 1
    %p184 = por %p182, %p183
    %p185 = scmp.ne.s32.totalorder %s177, %s180
    %p186 = scmp.eq.s32.totalorder %s15, 0
    %p187 = por %p185, %p186
    %p188 = scmp.ne.s32.totalorder %s177, %s180
    %p189 = scmp.eq.s32.totalorder %s20, 1
    %p190 = por %p188, %p189
    %p191 = scmp.ne.s32.totalorder %s180, %s181
    %p192 = scmp.eq.s32.totalorder %s20, 0
    %p193 = por %p191, %p192
    %p194 = scmp.ne.s32.totalorder %s180, %s181
    %p195 = scmp.eq.s32.totalorder %s21, 1
    %p196 = por %p194, %p195
    %p198 = scmp.ne.s32.totalorder %s181, %s197
    %p199 = scmp.eq.s32.totalorder %s21, 0
    %p200 = por %p198, %p199
    %p201 = scmp.le.s32.totalorder 1, %s15
    %p202 = scmp.lt.s32.totalorder %s15, 3
    %p203 = pnand %p201, %p202
    %p204 = pneg %p203
    // Predicated region
    $region9: #{tpu_custom_call.1} parent=5 // pred_check
      _
    $region10: #{tpu_custom_call.1} parent=5 // pred_check_branch
      %206 = sbr.rel (%p203) target = $region12
    $region11: #{tpu_custom_call.1} parent=5 // pred_region
      %s207 = ssub.s32 %s15, 1
      // Predicated region
      $region13: #{tpu_custom_call.1} parent=11 // pred_check
        %p208 = pneg %p62
      $region14: #{tpu_custom_call.1} parent=11 // pred_check_branch
        %210 = sbr.rel (%p208) target = $region16
      $region15: #{tpu_custom_call.1} parent=11 // pred_region
        _
      $region16: #{tpu_custom_call.1} parent=11 // pred_fallthru
        _
      // Predicated region
      $region17: #{tpu_custom_call.1} parent=11 // pred_check
        %p211 = pneg %p83
      $region18: #{tpu_custom_call.1} parent=11 // pred_check_branch
        %213 = sbr.rel (%p211) target = $region20
      $region19: #{tpu_custom_call.1} parent=11 // pred_region
        _
      $region20: #{tpu_custom_call.1} parent=11 // pred_fallthru
        _
      // Predicated region
      $region21: #{tpu_custom_call.1} parent=11 // pred_check
        %p214 = pneg %p104
      $region22: #{tpu_custom_call.1} parent=11 // pred_check_branch
        %216 = sbr.rel (%p214) target = $region24
      $region23: #{tpu_custom_call.1} parent=11 // pred_region
        _
      $region24: #{tpu_custom_call.1} parent=11 // pred_fallthru
        _
      // Predicated region
      $region25: #{tpu_custom_call.1} parent=11 // pred_check
        %p217 = pneg %p125
      $region26: #{tpu_custom_call.1} parent=11 // pred_check_branch
        %219 = sbr.rel (%p217) target = $region28
      $region27: #{tpu_custom_call.1} parent=11 // pred_region
        _
      $region28: #{tpu_custom_call.1} parent=11 // pred_fallthru
        _
      // Predicated region
      $region29: #{tpu_custom_call.1} parent=11 // pred_check
        %p220 = pneg %p146
      $region30: #{tpu_custom_call.1} parent=11 // pred_check_branch
        %222 = sbr.rel (%p220) target = $region32
      $region31: #{tpu_custom_call.1} parent=11 // pred_region
        _
      $region32: #{tpu_custom_call.1} parent=11 // pred_fallthru
        _
      // Predicated region
      $region33: #{tpu_custom_call.1} parent=11 // pred_check
        %p223 = pneg %p167
      $region34: #{tpu_custom_call.1} parent=11 // pred_check_branch
        %225 = sbr.rel (%p223) target = $region36
      $region35: #{tpu_custom_call.1} parent=11 // pred_region
        _
      $region36: #{tpu_custom_call.1} parent=11 // pred_fallthru
        _
    $region12: #{tpu_custom_call.1} parent=5 // pred_fallthru
      _
    %p226 = scmp.lt.s32.totalorder %s15, 2
    // Predicated region
    $region37: #{tpu_custom_call.1} parent=5 // pred_check
      %p227 = pneg %p226
    $region38: #{tpu_custom_call.1} parent=5 // pred_check_branch
      %229 = sbr.rel (%p227) target = $region40
    $region39: #{tpu_custom_call.1} parent=5 // pred_region
      // Predicated region
      $region41: #{tpu_custom_call.1} parent=39 // pred_check
        %p230 = pneg %p35
      $region42: #{tpu_custom_call.1} parent=39 // pred_check_branch
        %232 = sbr.rel (%p230) target = $region44
      $region43: #{tpu_custom_call.1} parent=39 // pred_region
        %s233 = smul.u32 4, %s15
        %p234 = scmp.lt.s32.totalorder %s233, 7
        %s235 = scalar_select %p234, %s233, 7
        %s236 = smul.addr %s235, 8
        %s237 = scalar_lea.vmem %s0, %s236
        %s238 = smul.u32 4, %s15
      $region44: #{tpu_custom_call.1} parent=39 // pred_fallthru
        _
    $region40: #{tpu_custom_call.1} parent=5 // pred_fallthru
      _
    %p239 = scmp.le.s32.totalorder 1, %s15
    %p240 = scmp.lt.s32.totalorder %s15, 3
    %p241 = pnand %p239, %p240
    %p242 = pneg %p241
    // Predicated region
    $region45: #{tpu_custom_call.1} parent=5 // pred_check
      _
    $region46: #{tpu_custom_call.1} parent=5 // pred_check_branch
      %244 = sbr.rel (%p241) target = $region48
    $region47: #{tpu_custom_call.1} parent=5 // pred_region
      %s245 = ssub.s32 %s15, 1
      %s246 = smul.u32 4, %s20
      %p247 = scmp.lt.s32.totalorder %s246, 7
      %s248 = scalar_select %p247, %s246, 7
      %s249 = smul.addr %s248, 8
      %s250 = scalar_lea.vmem %s0, %s249
      %p251 = pneg %p41
      %p252 = pneg %p38
      %p253 = pneg %p62
      %p254 = pneg %p59
      %p255 = pneg %p83
      %p256 = pneg %p80
      %p257 = pneg %p104
      %p258 = pneg %p101
      %p259 = pneg %p125
      %p260 = pneg %p122
      %p261 = pneg %p146
      %p262 = pneg %p143
      %p263 = pneg %p167
      %p264 = pneg %p164
      %p265 = pneg %p193
      %p266 = pneg %p190
      %s267 = smul.u32 4, %s20
      %p268 = scmp.lt.s32.totalorder %s267, 7
      %s269 = scalar_select %p268, %s267, 7
      %s270 = smul.addr %s269, 8
      %s271 = scalar_lea.vmem %s7, %s270
      %s272 = smul.u32 4, %s20
      %p273 = scmp.lt.s32.totalorder %s272, 7
      %s274 = scalar_select %p273, %s272, 7
      %s275 = smul.addr %s274, 8
      %s276 = scalar_lea.vmem %s0, %s275
      %s277 = smul.u32 4, %s20
      %s278 = smul.u32 4, %s20
      %p279 = scmp.lt.s32.totalorder %s278, 7
      %s280 = scalar_select %p279, %s278, 7
      %s281 = smul.addr %s280, 8
      %s282 = scalar_lea.vmem %s7, %s281
      %s283 = smul.u32 4, %s20
      %v284 = vld [vmem:[%s276] sm:$0xff]
      %v285 = vld [vmem:[%s276 + $0x8] sm:$0xff]
      %v286 = vld [vmem:[%s276 + $0x10] sm:$0xff]
      %v287 = vld [vmem:[%s276 + $0x18] sm:$0xff]
      %v288 = vld [vmem:[%s1] sm:$0xff]
      %v289 = vld [vmem:[%s1 + $0x8] sm:$0xff]
      %v290 = vld [vmem:[%s2] sm:$0x1]
      %v292 = vlaneseq
      %v293 = vshrl.u32 %v292, 7
      %v294 = vsub.s32 0, %v293
      %v295 = vrot.slane %v290, %v294
      %vm297 = vcmask 130048
      %v299 = vsel %vm297, %v284, 0
      %v302 = vsel %vm297, %v285, 0
      %v305 = vsel %vm297, %v286, 0
      %v308 = vsel %vm297, %v287, 0
      %310 = vmatprep.subr.mxu0 0.0
      %311 = vmatpush1.msra.mxu0 %v288
      %312 = vmatprep.subr.mxu0 0.0
      %313 = vmatpush1.msra.mxu0 %v289
      %314 = vmatprep.subr.mxu0 0.0
      %315 = vmatpush1.msra.mxu0 0.0
      %316 = vmatprep.subr.mxu0 0.0
      %317 = vmatpush1.msra.mxu0 0.0
      %318 = vmatprep.subr.mxu0 0.0
      %319 = vmatpush1.msra.mxu0 0.0
      %320 = vmatprep.subr.mxu0 0.0
      %321 = vmatpush1.msra.mxu0 0.0
      %322 = vmatprep.subr.mxu0 0.0
      %323 = vmatpush1.msra.mxu0 0.0
      %324 = vmatprep.subr.mxu0 0.0
      %325 = vmatpush1.msra.mxu0 0.0
      %326 = vmatprep.subr.mxu0 0.0
      %327 = vmatpush1.msra.mxu0 0.0
      %328 = vmatprep.subr.mxu0 0.0
      %329 = vmatpush1.msra.mxu0 0.0
      %330 = vmatprep.subr.mxu0 0.0
      %331 = vmatpush1.msra.mxu0 0.0
      %332 = vmatprep.subr.mxu0 0.0
      %333 = vmatpush1.msra.mxu0 0.0
      %334 = vmatprep.subr.mxu0 0.0
      %335 = vmatpush1.msra.mxu0 0.0
      %336 = vmatprep.subr.mxu0 0.0
      %337 = vmatpush1.msra.mxu0 0.0
      %338 = vmatprep.subr.mxu0 0.0
      %339 = vmatpush1.msra.mxu0 0.0
      %340 = vmatprep.subr.mxu0 0.0
      %341 = vmatpush1.msra.mxu0 0.0
      %342 = vmatprep.subr.mxu0 0.0
      %343 = vmatpush1.msra.mxu0 0.0
      %344 = vmatprep.subr.mxu0 0.0
      %345 = vmatpush1.msra.mxu0 0.0
      %346 = vmatprep.subr.mxu0 0.0
      %347 = vmatpush1.msra.mxu0 0.0
      %348 = vmatprep.subr.mxu0 0.0
      %349 = vmatpush1.msra.mxu0 0.0
      %350 = vmatprep.subr.mxu0 0.0
      %351 = vmatpush1.msra.mxu0 0.0
      %352 = vmatprep.subr.mxu0 0.0
      %353 = vmatpush1.msra.mxu0 0.0
      %354 = vmatprep.subr.mxu0 0.0
      %355 = vmatpush1.msra.mxu0 0.0
      %356 = vmatprep.subr.mxu0 0.0
      %357 = vmatpush1.msra.mxu0 0.0
      %358 = vmatprep.subr.mxu0 0.0
      %359 = vmatpush1.msra.mxu0 0.0
      %360 = vmatprep.subr.mxu0 0.0
      %361 = vmatpush1.msra.mxu0 0.0
      %362 = vmatprep.subr.mxu0 0.0
      %363 = vmatpush1.msra.mxu0 0.0
      %364 = vmatprep.subr.mxu0 0.0
      %365 = vmatpush1.msra.mxu0 0.0
      %366 = vmatprep.subr.mxu0 0.0
      %367 = vmatpush1.msra.mxu0 0.0
      %368 = vmatprep.subr.mxu0 0.0
      %369 = vmatpush1.msra.mxu0 0.0
      %370 = vmatprep.subr.mxu0 0.0
      %371 = vmatpush1.msra.mxu0 0.0
      %372 = vmatprep.subr.mxu0 0.0
      %373 = vmatpush1.msra.mxu0 0.0
      %374 = vmatprep.mubr.f32.mxu0 0.0
      %375 = vmatmul.mubr.f32.gmra.mrb[0].mxu0 %v299
      %v376 = vpop.f32.mrb[0].mxu0
      %v377 = vadd.f32 %v295, %v376
      %v378 = vpop.f32.mrb[0].mxu0
      %379 = vmatprep.mubr.f32.mxu0 0.0
      %380 = vmatmul.mubr.f32.gmra.mrb[0].mxu0 %v302
      %v381 = vpop.f32.mrb[0].mxu0
      %v382 = vadd.f32 %v295, %v381
      %v383 = vpop.f32.mrb[0].mxu0
      %384 = vmatprep.mubr.f32.mxu0 0.0
      %385 = vmatmul.mubr.f32.gmra.mrb[0].mxu0 %v305
      %v386 = vpop.f32.mrb[0].mxu0
      %v387 = vadd.f32 %v295, %v386
      %v388 = vpop.f32.mrb[0].mxu0
      %389 = vmatprep.mubr.f32.mxu0 0.0
      %390 = vmatmul.mubr.f32.gmra.mrb[0].mxu0 %v308
      %v391 = vpop.f32.mrb[0].mxu0
      %v392 = vadd.f32 %v295, %v391
      %v393 = vpop.f32.mrb[0].mxu0
      %394 = vdwg.mxu0
      %v395 = vmax.f32 %v377, 0.0
      %v396 = vmax.f32 %v382, 0.0
      %v397 = vmax.f32 %v387, 0.0
      %v398 = vmax.f32 %v392, 0.0
      %v399 = vld [vmem:[%s3] sm:$0xff]
      %v400 = vld [vmem:[%s3 + $0x8] sm:$0xff]
      %v401 = vld [vmem:[%s3 + $0x10] sm:$0xff]
      %v402 = vld [vmem:[%s3 + $0x18] sm:$0xff]
      %v403 = vld [vmem:[%s3 + $0x20] sm:$0xff]
      %v404 = vld [vmem:[%s3 + $0x28] sm:$0xff]
      %v405 = vld [vmem:[%s3 + $0x30] sm:$0xff]
      %v406 = vld [vmem:[%s3 + $0x38] sm:$0xff]
      %v407 = vld [vmem:[%s4] sm:$0x1]
      %v409 = vlaneseq
      %v410 = vshrl.u32 %v409, 7
      %v411 = vsub.s32 0, %v410
      %v412 = vrot.slane %v407, %v411
      %vm414 = vcmask 523264
      %v416 = vsel %vm414, %v395, 0
      %v419 = vsel %vm414, %v396, 0
      %v422 = vsel %vm414, %v397, 0
      %v425 = vsel %vm414, %v398, 0
      %427 = vmatprep.subr.mxu0 0.0
      %428 = vmatpush1.msra.mxu0 %v399
      %429 = vmatprep.subr.mxu0 0.0
      %430 = vmatpush1.msra.mxu0 %v400
      %431 = vmatprep.subr.mxu0 0.0
      %432 = vmatpush1.msra.mxu0 %v401
      %433 = vmatprep.subr.mxu0 0.0
      %434 = vmatpush1.msra.mxu0 %v402
      %435 = vmatprep.subr.mxu0 0.0
      %436 = vmatpush1.msra.mxu0 %v403
      %437 = vmatprep.subr.mxu0 0.0
      %438 = vmatpush1.msra.mxu0 %v404
      %439 = vmatprep.subr.mxu0 0.0
      %440 = vmatpush1.msra.mxu0 %v405
      %441 = vmatprep.subr.mxu0 0.0
      %442 = vmatpush1.msra.mxu0 %v406
      %443 = vmatprep.subr.mxu0 0.0
      %444 = vmatpush1.msra.mxu0 0.0
      %445 = vmatprep.subr.mxu0 0.0
      %446 = vmatpush1.msra.mxu0 0.0
      %447 = vmatprep.subr.mxu0 0.0
      %448 = vmatpush1.msra.mxu0 0.0
      %449 = vmatprep.subr.mxu0 0.0
      %450 = vmatpush1.msra.mxu0 0.0
      %451 = vmatprep.subr.mxu0 0.0
      %452 = vmatpush1.msra.mxu0 0.0
      %453 = vmatprep.subr.mxu0 0.0
      %454 = vmatpush1.msra.mxu0 0.0
      %455 = vmatprep.subr.mxu0 0.0
      %456 = vmatpush1.msra.mxu0 0.0
      %457 = vmatprep.subr.mxu0 0.0
      %458 = vmatpush1.msra.mxu0 0.0
      %459 = vmatprep.subr.mxu0 0.0
      %460 = vmatpush1.msra.mxu0 0.0
      %461 = vmatprep.subr.mxu0 0.0
      %462 = vmatpush1.msra.mxu0 0.0
      %463 = vmatprep.subr.mxu0 0.0
      %464 = vmatpush1.msra.mxu0 0.0
      %465 = vmatprep.subr.mxu0 0.0
      %466 = vmatpush1.msra.mxu0 0.0
      %467 = vmatprep.subr.mxu0 0.0
      %468 = vmatpush1.msra.mxu0 0.0
      %469 = vmatprep.subr.mxu0 0.0
      %470 = vmatpush1.msra.mxu0 0.0
      %471 = vmatprep.subr.mxu0 0.0
      %472 = vmatpush1.msra.mxu0 0.0
      %473 = vmatprep.subr.mxu0 0.0
      %474 = vmatpush1.msra.mxu0 0.0
      %475 = vmatprep.subr.mxu0 0.0
      %476 = vmatpush1.msra.mxu0 0.0
      %477 = vmatprep.subr.mxu0 0.0
      %478 = vmatpush1.msra.mxu0 0.0
      %479 = vmatprep.subr.mxu0 0.0
      %480 = vmatpush1.msra.mxu0 0.0
      %481 = vmatprep.subr.mxu0 0.0
      %482 = vmatpush1.msra.mxu0 0.0
      %483 = vmatprep.subr.mxu0 0.0
      %484 = vmatpush1.msra.mxu0 0.0
      %485 = vmatprep.subr.mxu0 0.0
      %486 = vmatpush1.msra.mxu0 0.0
      %487 = vmatprep.subr.mxu0 0.0
      %488 = vmatpush1.msra.mxu0 0.0
      %489 = vmatprep.subr.mxu0 0.0
      %490 = vmatpush1.msra.mxu0 0.0
      %491 = vmatprep.mubr.f32.mxu0 0.0
      %492 = vmatmul.mubr.f32.gmra.mrb[0].mxu0 %v416
      %v493 = vpop.f32.mrb[0].mxu0
      %v494 = vadd.f32 %v412, %v493
      %v495 = vpop.f32.mrb[0].mxu0
      %496 = vmatprep.mubr.f32.mxu0 0.0
      %497 = vmatmul.mubr.f32.gmra.mrb[0].mxu0 %v419
      %v498 = vpop.f32.mrb[0].mxu0
      %v499 = vadd.f32 %v412, %v498
      %v500 = vpop.f32.mrb[0].mxu0
      %501 = vmatprep.mubr.f32.mxu0 0.0
      %502 = vmatmul.mubr.f32.gmra.mrb[0].mxu0 %v422
      %v503 = vpop.f32.mrb[0].mxu0
      %v504 = vadd.f32 %v412, %v503
      %v505 = vpop.f32.mrb[0].mxu0
      %506 = vmatprep.mubr.f32.mxu0 0.0
      %507 = vmatmul.mubr.f32.gmra.mrb[0].mxu0 %v425
      %v508 = vpop.f32.mrb[0].mxu0
      %v509 = vadd.f32 %v412, %v508
      %v510 = vpop.f32.mrb[0].mxu0
      %511 = vdwg.mxu0
      %v512 = vmax.f32 %v494, 0.0
      %v513 = vmax.f32 %v499, 0.0
      %v514 = vmax.f32 %v504, 0.0
      %v515 = vmax.f32 %v509, 0.0
      %v516 = vld [vmem:[%s5] sm:$0x1]
      %v518 = vlaneseq
      %v519 = vshrl.u32 %v518, 7
      %v520 = vsub.s32 0, %v519
      %v521 = vrot.slane %v516, %v520
      %v523 = vmul.f32 %v512, %v521
      %v524 = vmul.f32 %v513, %v521
      %v525 = vmul.f32 %v514, %v521
      %v526 = vmul.f32 %v515, %v521
      %vm527 = vcmask 261120
      %v528 = vsel %vm527, %v523, 0.0
      %529 = vadd.xlane.f32.xlu0 %v528
      %v530 = vpop.xlane.xlu0 %529
      %v531 = vsel %vm527, %v524, 0.0
      %532 = vadd.xlane.f32.xlu0 %v531
      %v533 = vpop.xlane.xlu0 %532
      %v534 = vsel %vm527, %v525, 0.0
      %535 = vadd.xlane.f32.xlu0 %v534
      %v536 = vpop.xlane.xlu0 %535
      %v537 = vsel %vm527, %v526, 0.0
      %538 = vadd.xlane.f32.xlu0 %v537
      %v539 = vpop.xlane.xlu0 %538
      %v540 = vld [vmem:[#allocation2] sm:$0x1]
      %v542 = vlaneseq
      %v543 = vshrl.u32 %v542, 7
      %v544 = vsub.s32 0, %v543
      %v545 = vrot.slane %v540, %v544
      %v547 = vadd.f32 %v530, %v545
      %v548 = vadd.f32 %v533, %v545
      %v549 = vadd.f32 %v536, %v545
      %v550 = vadd.f32 %v539, %v545
      %vm551 = vcmask 7168
      %552 = vst.msk [vmem:[%s282] sm:$0xff] %vm551, %v547
      %553 = vst.msk [vmem:[%s282 + $0x8] sm:$0xff] %vm551, %v548
      %554 = vst.msk [vmem:[%s282 + $0x10] sm:$0xff] %vm551, %v549
      %555 = vst.msk [vmem:[%s282 + $0x18] sm:$0xff] %vm551, %v550
      %s556 = smul.u32 4, %s20
      %p557 = scmp.lt.s32.totalorder %s556, 7
      %s558 = scalar_select %p557, %s556, 7
      %s559 = smul.addr %s558, 8
      %s560 = scalar_lea.vmem %s7, %s559
      // Predicated region
      $region49: #{tpu_custom_call.1} parent=47 // pred_check
        %p561 = pneg %p190
      $region50: #{tpu_custom_call.1} parent=47 // pred_check_branch
        %563 = sbr.rel (%p561) target = $region52
      $region51: #{tpu_custom_call.1} parent=47 // pred_region
        %s564 = smul.u32 4, %s20
      $region52: #{tpu_custom_call.1} parent=47 // pred_fallthru
        _
    $region48: #{tpu_custom_call.1} parent=5 // pred_fallthru
      _
    %p565 = scmp.le.s32.totalorder 2, %s15
    // Predicated region
    $region53: #{tpu_custom_call.1} parent=5 // pred_check
      %p566 = pneg %p565
    $region54: #{tpu_custom_call.1} parent=5 // pred_check_branch
      %568 = sbr.rel (%p566) target = $region56
    $region55: #{tpu_custom_call.1} parent=5 // pred_region
      %s569 = ssub.s32 %s15, 2
      // Predicated region
      $region57: #{tpu_custom_call.1} parent=55 // pred_check
        %p570 = pneg %p196
      $region58: #{tpu_custom_call.1} parent=55 // pred_check_branch
        %572 = sbr.rel (%p570) target = $region60
      $region59: #{tpu_custom_call.1} parent=55 // pred_region
        %s573 = smul.u32 4, %s21
        %p574 = scmp.lt.s32.totalorder %s573, 7
        %s575 = scalar_select %p574, %s573, 7
        %s576 = smul.addr %s575, 8
        %s577 = scalar_lea.vmem %s7, %s576
      $region60: #{tpu_custom_call.1} parent=55 // pred_fallthru
        _
    $region56: #{tpu_custom_call.1} parent=5 // pred_fallthru
      _
  $region6: #{tpu_custom_call.1} parent=0 // loop_footer
    %s19 = sadd.s32 1, %s15
  $region7: #{tpu_custom_call.1} parent=0 // loop_footer_branch
    %14 = sbr.rel target = $region3
  $region8: #{tpu_custom_call.1} parent=0 // loop_exit
    _

</llo_original>
